<compile_context>
chip_gen: v7x
topology: tpu7x:2x2x1
jax: 0.10.0
libtpu: 0.0.40
codegen_flags: <defaults>
</compile_context>

<pallas_src>
import functools

import jax
import jax.numpy as jnp
from jax.experimental import pallas as pl
from jax.experimental.pallas import tpu as pltpu


def _ls_ce_kernel(x_ref, lbl_ref, out_ref, *,
                  lb_pos, lb_neg, lb_ignore, num_classes, p_total, t_p):
    i = pl.program_id(1)

    x = x_ref[0].astype(jnp.float32)      # (C, T)  class on sublanes, pixels on lanes
    lbl = lbl_ref[0]                      # (1, T)  int32

    # Validity mask: label != ignore AND global column index within the true extent
    # (handles the ragged last tile without padding the inputs in HBM).
    col = i * t_p + jax.lax.broadcasted_iota(jnp.int32, lbl.shape, 1)   # (1, T)
    valid = jnp.logical_and(lbl != lb_ignore, col < p_total)            # (1, T) bool
    lbl_clean = jnp.where(valid, lbl, 0)                                # (1, T)

    # Reduce directly from x (single pass for max / sum / target-gather), keep only the
    # fused exp(x - m) as a full (C, T) temporary.
    m = jnp.max(x, axis=0, keepdims=True)                               # (1, T)
    sum_x = jnp.sum(x, axis=0, keepdims=True)                           # (1, T)
    cls = jax.lax.broadcasted_iota(jnp.int32, x.shape, 0)               # (C, T)
    x_tgt = jnp.sum(jnp.where(cls == lbl_clean, x, 0.0),
                    axis=0, keepdims=True)                              # (1, T)
    lse = jnp.log(jnp.sum(jnp.exp(x - m), axis=0, keepdims=True))       # (1, T)

    sum_z = sum_x - num_classes * m
    z_tgt = x_tgt - m

    # loss = -sum_c w_c * (z_c - lse), with w_c = lb_pos at target else lb_neg.
    w_sum = lb_neg * num_classes + (lb_pos - lb_neg)
    loss = -(lb_neg * sum_z + (lb_pos - lb_neg) * z_tgt - w_sum * lse)  # (1, T)

    # Keep the select (not a multiply): padded OOB lanes may contain garbage.
    loss = jnp.where(valid, loss, 0.0)
    cnt = jnp.where(valid, 1.0, 0.0)

    # Pack [loss; count] into one (2, T) lane-dense slab (row 0 = loss, row 1 = count).
    row = jax.lax.broadcasted_iota(jnp.int32, (2, loss.shape[1]), 0)
    out_ref[0, 0] = jnp.where(row == 0, loss, cnt)


def label_smooth_softmax_ce(logits, label, *, lb_smooth=0.1, reduction="mean",
                            lb_ignore=-100, bf16_inputs=False,
                            tile_bytes_target=4 << 20):
    """logits: (N, C, H, W) float; label: (N, H, W) int. Mirrors LabelSmoothSoftmaxCEV1."""
    N, C, H, W = logits.shape
    HW = H * W
    lb_pos = 1.0 - float(lb_smooth)
    lb_neg = float(lb_smooth) / C

    x4 = logits
    if bf16_inputs and x4.dtype == jnp.float32:
        # Halves HBM traffic (biggest lever on v5e/v6e); softmax math stays in f32.
        x4 = x4.astype(jnp.bfloat16)

    if HW < 128:
        # Classification-shaped input: fold the batch onto the lane axis so lanes stay
        # dense instead of padding a single pixel to 128 lanes.
        x = jnp.transpose(x4.reshape(N, C, HW), (1, 0, 2)).reshape(1, C, N * HW)
        y = label.astype(jnp.int32).reshape(1, 1, N * HW)
        n_eff, P = 1, N * HW
    else:
        # Segmentation-shaped input: free reshape, class on sublanes, pixels on lanes.
        x = x4.reshape(N, C, HW)
        y = label.astype(jnp.int32).reshape(N, 1, HW)
        n_eff, P = N, HW

    itemsize = jnp.dtype(x.dtype).itemsize

    # Generation-aware VMEM budget (v7x: 64 MiB, v5e/v6e: 128 MiB).
    try:
        vmem_cap = int(pltpu.get_tpu_info().vmem_capacity_bytes)
    except Exception:
        vmem_cap = 64 << 20
    budget = vmem_cap * 5 // 8

    def _vmem_need(t):
        return (2 * C * t * itemsize      # double-buffered logits tile
                + 2 * t * 4               # double-buffered label tile (int32)
                + 4 * C * t * 4           # live f32 temporaries in the body
                + 2 * 2 * t * 4           # double-buffered packed output tile
                + (2 << 20))              # headroom

    if P < 128:
        t = P                             # block == full extent, no padding needed
    else:
        # Target ~tile_bytes_target bytes of logits per tile, >= 512 lanes, <= HW.
        t = max(512, int(tile_bytes_target) // max(C * itemsize, 1))
        t = min(t, pl.cdiv(P, 128) * 128)
        t = max(128, (t // 128) * 128)
        while t > 128 and _vmem_need(t) > budget:   # shrink t, don't starve vmem_limit
            t -= 128
    n_p = pl.cdiv(P, t)

    vmem_limit = int(min(max(_vmem_need(t), 16 << 20), vmem_cap))

    kernel = functools.partial(
        _ls_ce_kernel,
        lb_pos=lb_pos, lb_neg=lb_neg, lb_ignore=int(lb_ignore),
        num_classes=C, p_total=P, t_p=t)

    out = pl.pallas_call(
        kernel,
        out_shape=jax.ShapeDtypeStruct((n_eff, n_p, 2, t), jnp.float32),
        grid_spec=pltpu.PrefetchScalarGridSpec(
            num_scalar_prefetch=0,
            grid=(n_eff, n_p),
            in_specs=[
                pl.BlockSpec((1, C, t), lambda n, i: (n, 0, i)),
                pl.BlockSpec((1, 1, t), lambda n, i: (n, 0, i)),
            ],
            out_specs=pl.BlockSpec((1, 1, 2, t), lambda n, i: (n, i, 0, 0)),
        ),
        compiler_params=pltpu.CompilerParams(
            dimension_semantics=("parallel", "parallel"),
            vmem_limit_bytes=vmem_limit),
    )(x, y)

    loss_sum = jnp.sum(out[:, :, 0, :])
    n_valid = jnp.sum(out[:, :, 1, :])

    if reduction == "mean":
        # NOTE: matches PyTorch semantics — NaN/Inf if every pixel is ignored.
        return loss_sum / n_valid
    if reduction == "sum":
        return loss_sum
    # TODO(synk): reduction='none' would require returning the per-pixel loss map.
    raise NotImplementedError("only 'mean' and 'sum' reductions implemented")


def _reference(logits, label, lb_smooth=0.1, lb_ignore=-100):
    N, C, H, W = logits.shape
    ignore = label == lb_ignore
    n_valid = jnp.sum(~ignore)
    lbl = jnp.where(ignore, 0, label)
    lb_pos, lb_neg = 1.0 - lb_smooth, lb_smooth / C
    onehot = jax.nn.one_hot(lbl, C, axis=1, dtype=logits.dtype)     # (N,C,H,W)
    weights = jnp.where(onehot > 0, lb_pos, lb_neg)
    logs = jax.nn.log_softmax(logits, axis=1)
    loss = -jnp.sum(logs * weights, axis=1)
    loss = jnp.where(ignore, 0.0, loss)
    return jnp.sum(loss) / n_valid


if __name__ == "__main__":
    key = jax.random.PRNGKey(0)
    k1, k2, k3, k4 = jax.random.split(key, 4)

    # --- segmentation-shaped check (N, C, H, W) ---
    N, C, H, W = 2, 4, 16, 16
    logits = jax.random.normal(k1, (N, C, H, W), dtype=jnp.float32)
    label = jax.random.randint(k2, (N, H, W), 0, C, dtype=jnp.int32)
    label = label.at[0, 0, :4].set(-100)
    label = label.at[1, 5, 7].set(-100)

    out = label_smooth_softmax_ce(logits, label, lb_smooth=0.1,
                                  reduction="mean", lb_ignore=-100)
    out = jax.block_until_ready(out)
    ref = _reference(logits, label)
    assert jnp.allclose(out, ref, atol=1e-5, rtol=1e-5), (out, ref)

    # --- classification-shaped check (HW == 1 -> batch-on-lanes layout path) ---
    Nc, Cc = 16, 8
    logits_c = jax.random.normal(k3, (Nc, Cc, 1, 1), dtype=jnp.float32)
    label_c = jax.random.randint(k4, (Nc, 1, 1), 0, Cc, dtype=jnp.int32)
    label_c = label_c.at[3, 0, 0].set(-100)

    out_c = label_smooth_softmax_ce(logits_c, label_c, lb_smooth=0.1,
                                    reduction="mean", lb_ignore=-100)
    out_c = jax.block_until_ready(out_c)
    ref_c = _reference(logits_c, label_c)
    assert jnp.allclose(out_c, ref_c, atol=1e-5, rtol=1e-5), (out_c, ref_c)

    # --- bf16 input path (reduced-precision HBM traffic; loose tolerance) ---
    out_b = label_smooth_softmax_ce(logits, label, lb_smooth=0.1,
                                    reduction="mean", lb_ignore=-100,
                                    bf16_inputs=True)
    out_b = jax.block_until_ready(out_b)
    assert jnp.allclose(out_b, ref, atol=0.1, rtol=0.1), (out_b, ref)

    print("KERNEL_OK")
</pallas_src>

<mosaic_0001>
module attributes {stable_mosaic.version = 11 : i64} {
  func.func @_ls_ce_kernel(%arg0: i32, %arg1: i32, %arg2: memref<1x4x256xf32, #tpu.memory_space<vmem>>, %arg3: memref<1x1x256xi32, #tpu.memory_space<vmem>>, %arg4: memref<1x1x2x256xf32, #tpu.memory_space<vmem>>) attributes {dimension_semantics = [#tpu.dimension_semantics<parallel>, #tpu.dimension_semantics<parallel>], iteration_bounds = array<i64: 2, 1>, scalar_prefetch = 0 : i64, scratch_operands = 0 : i64, tpu.core_type = #tpu.core_type<tc>, window_params = [{transform_indices = @transform_0, window_bounds = array<i64: 1, 4, 256>}, {transform_indices = @transform_1, window_bounds = array<i64: 1, 1, 256>}, {transform_indices = @transform_2, window_bounds = array<i64: 1, 1, 2, 256>}]} {
    %c0 = arith.constant 0 : index
    %c0_0 = arith.constant 0 : index
    %c0_1 = arith.constant 0 : index
    %0 = vector.load %arg2[%c0, %c0_0, %c0_1] : memref<1x4x256xf32, #tpu.memory_space<vmem>>, vector<1x4x256xf32>
    %1 = vector.shape_cast %0 : vector<1x4x256xf32> to vector<4x256xf32>
    %c0_2 = arith.constant 0 : index
    %c0_3 = arith.constant 0 : index
    %c0_4 = arith.constant 0 : index
    %2 = vector.load %arg3[%c0_2, %c0_3, %c0_4] : memref<1x1x256xi32, #tpu.memory_space<vmem>>, vector<1x1x256xi32>
    %3 = vector.shape_cast %2 : vector<1x1x256xi32> to vector<1x256xi32>
    %c256_i32 = arith.constant 256 : i32
    %4 = arith.muli %arg1, %c256_i32 : i32
    %5 = tpu.iota {dimensions = array<i32: 1>} : vector<1x256xi32>
    %6 = vector.broadcast %4 : i32 to vector<1x256xi32>
    %7 = arith.addi %6, %5 : vector<1x256xi32>
    %c-100_i32 = arith.constant -100 : i32
    %8 = vector.broadcast %c-100_i32 : i32 to vector<1x256xi32>
    %9 = arith.cmpi ne, %3, %8 : vector<1x256xi32>
    %c256_i32_5 = arith.constant 256 : i32
    %10 = vector.broadcast %c256_i32_5 : i32 to vector<1x256xi32>
    %11 = arith.cmpi slt, %7, %10 : vector<1x256xi32>
    %12 = arith.andi %9, %11 : vector<1x256xi1>
    %c0_i32 = arith.constant 0 : i32
    %13 = vector.broadcast %c0_i32 : i32 to vector<1x256xi32>
    %14 = arith.select %12, %3, %13 : vector<1x256xi1>, vector<1x256xi32>
    %cst = arith.constant dense<0xFF800000> : vector<256xf32>
    %15 = vector.multi_reduction <maximumf>, %1, %cst [0] : vector<4x256xf32> to vector<256xf32>
    %16 = vector.shape_cast %15 : vector<256xf32> to vector<1x256xf32>
    %cst_6 = arith.constant dense<0.000000e+00> : vector<256xf32>
    %17 = vector.multi_reduction <add>, %1, %cst_6 [0] : vector<4x256xf32> to vector<256xf32>
    %18 = vector.shape_cast %17 : vector<256xf32> to vector<1x256xf32>
    %19 = tpu.iota {dimensions = array<i32: 0>} : vector<4x256xi32>
    %20 = vector.broadcast %14 : vector<1x256xi32> to vector<4x256xi32>
    %21 = arith.cmpi eq, %19, %20 : vector<4x256xi32>
    %cst_7 = arith.constant 0.000000e+00 : f32
    %22 = vector.broadcast %cst_7 : f32 to vector<4x256xf32>
    %23 = arith.select %21, %1, %22 : vector<4x256xi1>, vector<4x256xf32>
    %cst_8 = arith.constant dense<0.000000e+00> : vector<256xf32>
    %24 = vector.multi_reduction <add>, %23, %cst_8 [0] : vector<4x256xf32> to vector<256xf32>
    %25 = vector.shape_cast %24 : vector<256xf32> to vector<1x256xf32>
    %26 = vector.broadcast %16 : vector<1x256xf32> to vector<4x256xf32>
    %27 = arith.subf %1, %26 : vector<4x256xf32>
    %28 = math.exp %27 : vector<4x256xf32>
    %cst_9 = arith.constant dense<0.000000e+00> : vector<256xf32>
    %29 = vector.multi_reduction <add>, %28, %cst_9 [0] : vector<4x256xf32> to vector<256xf32>
    %30 = vector.shape_cast %29 : vector<256xf32> to vector<1x256xf32>
    %31 = math.log %30 : vector<1x256xf32>
    %cst_10 = arith.constant 4.000000e+00 : f32
    %32 = vector.broadcast %cst_10 : f32 to vector<1x256xf32>
    %33 = arith.mulf %32, %16 : vector<1x256xf32>
    %34 = arith.subf %18, %33 : vector<1x256xf32>
    %35 = arith.subf %25, %16 : vector<1x256xf32>
    %cst_11 = arith.constant 2.500000e-02 : f32
    %36 = vector.broadcast %cst_11 : f32 to vector<1x256xf32>
    %37 = arith.mulf %36, %34 : vector<1x256xf32>
    %cst_12 = arith.constant 8.750000e-01 : f32
    %38 = vector.broadcast %cst_12 : f32 to vector<1x256xf32>
    %39 = arith.mulf %38, %35 : vector<1x256xf32>
    %40 = arith.addf %37, %39 : vector<1x256xf32>
    %cst_13 = arith.constant 9.750000e-01 : f32
    %41 = vector.broadcast %cst_13 : f32 to vector<1x256xf32>
    %42 = arith.mulf %41, %31 : vector<1x256xf32>
    %43 = arith.subf %40, %42 : vector<1x256xf32>
    %cst_14 = arith.constant 0.000000e+00 : f32
    %44 = vector.broadcast %cst_14 : f32 to vector<1x256xf32>
    %45 = arith.subf %44, %43 : vector<1x256xf32>
    %cst_15 = arith.constant 0.000000e+00 : f32
    %46 = vector.broadcast %cst_15 : f32 to vector<1x256xf32>
    %47 = arith.select %12, %45, %46 : vector<1x256xi1>, vector<1x256xf32>
    %cst_16 = arith.constant 1.000000e+00 : f32
    %cst_17 = arith.constant 0.000000e+00 : f32
    %48 = vector.broadcast %cst_16 : f32 to vector<1x256xf32>
    %49 = vector.broadcast %cst_17 : f32 to vector<1x256xf32>
    %50 = arith.select %12, %48, %49 : vector<1x256xi1>, vector<1x256xf32>
    %51 = tpu.iota {dimensions = array<i32: 0>} : vector<2x256xi32>
    %c0_i32_18 = arith.constant 0 : i32
    %52 = vector.broadcast %c0_i32_18 : i32 to vector<2x256xi32>
    %53 = arith.cmpi eq, %51, %52 : vector<2x256xi32>
    %54 = vector.shape_cast %47 : vector<1x256xf32> to vector<1x256xf32>
    %55 = vector.broadcast %54 : vector<1x256xf32> to vector<2x256xf32>
    %56 = vector.shape_cast %50 : vector<1x256xf32> to vector<1x256xf32>
    %57 = vector.broadcast %56 : vector<1x256xf32> to vector<2x256xf32>
    %58 = arith.select %53, %55, %57 : vector<2x256xi1>, vector<2x256xf32>
    %c0_19 = arith.constant 0 : index
    %c0_20 = arith.constant 0 : index
    %c0_21 = arith.constant 0 : index
    %c0_22 = arith.constant 0 : index
    %59 = vector.load %arg4[%c0_19, %c0_20, %c0_21, %c0_22] : memref<1x1x2x256xf32, #tpu.memory_space<vmem>>, vector<1x1x2x256xf32>
    %60 = vector.shape_cast %59 : vector<1x1x2x256xf32> to vector<2x256xf32>
    %61 = vector.shape_cast %58 : vector<2x256xf32> to vector<1x1x2x256xf32>
    tpu.vector_store %arg4[%c0_19, %c0_20, %c0_21, %c0_22], %61 {strides = array<i32>} : memref<1x1x2x256xf32, #tpu.memory_space<vmem>>, vector<1x1x2x256xf32>,
    return
  }
  func.func @transform_0(%arg0: i32, %arg1: i32) -> (i32, i32, i32) {
    %c0_i32 = arith.constant 0 : i32
    %c0_i32_0 = arith.constant 0 : i32
    return %arg0, %c0_i32, %arg1 : i32, i32, i32
  }
  func.func @transform_1(%arg0: i32, %arg1: i32) -> (i32, i32, i32) {
    %c0_i32 = arith.constant 0 : i32
    %c0_i32_0 = arith.constant 0 : i32
    return %arg0, %c0_i32, %arg1 : i32, i32, i32
  }
  func.func @transform_2(%arg0: i32, %arg1: i32) -> (i32, i32, i32, i32) {
    %c0_i32 = arith.constant 0 : i32
    %c0_i32_0 = arith.constant 0 : i32
    %c0_i32_1 = arith.constant 0 : i32
    return %arg0, %arg1, %c0_i32, %c0_i32_0 : i32, i32, i32, i32
  }
}

</mosaic_0001>

<llo_original>
// kernel: tpu_custom_call.1
$region0: #{tpu_custom_call.1}
  #allocation0 [shape = 'u32[]', space=smem, size = 0x4, offset = 0x4, fixed_abs, tag = 'smem constant byte address 0x4 - core index']
  #allocation1 [shape = 'u32[144,128]{1,0:T(1,128)}', space=vmem, size = 0x12000, scoped, tag = 'internal scratch']
  %s0 = inlined_call_operand.hbm [shape: f32[2,4,256], index: 0, kind: input, shape index: {}]
  %s1 = inlined_call_operand.hbm [shape: s32[2,1,256], index: 1, kind: input, shape index: {}]
  %s2 = inlined_call_operand.hbm [shape: f32[2,1,2,256], index: 2, kind: output, shape index: {}]
  %s3 = sld [smem:[#allocation0]]
  $region49: #{tpu_custom_call.1} parent=0
    _
  %s5 = ssub.s32 1, %s3
  %s6 = scalar_select 0, %s5, %s3
  $region1: #{tpu_custom_call.1} parent=0
    #allocation2 [shape = 'u8[8192]{0}', space=vmem, size = 0x2000, scoped, tag = 'input window, operand 0']
    #allocation3 [shape = 's32[2]{0}', space=sflag, size = 0x8, scoped, tag = 'scoped memory for tpu_custom_call.1']
    #allocation4 [shape = 's32[2]{0}', space=sflag, size = 0x8, scoped, tag = 'scoped memory for tpu_custom_call.1']
    #allocation5 [shape = 'u8[2048]{0}', space=vmem, size = 0x800, scoped, tag = 'input window, operand 1']
    #allocation6 [shape = 's32[2]{0}', space=sflag, size = 0x8, scoped, tag = 'scoped memory for tpu_custom_call.1']
    #allocation7 [shape = 'u8[4096]{0}', space=vmem, size = 0x1000, scoped, tag = 'output window, operand 0']
    %7 = vsyncpa [#allocation3], 0
    %s8 = scalar_lea.sflag [#allocation3], 1
    %9 = vsyncpa %s8, 0
    %10 = vsyncpa [#allocation6], 0
    %s11 = scalar_lea.sflag [#allocation6], 1
    %12 = vsyncpa %s11, 0
    %13 = vsyncpa [#allocation4], 0
    %s14 = scalar_lea.sflag [#allocation4], 1
    %15 = vsyncpa %s14, 0
    loop: start=0, step=1, limit=4
    $region2: #{tpu_custom_call.1} parent=1 // loop_pre_header
      _
    $region3: #{tpu_custom_call.1} parent=1 // loop_header
      %s17 = sphi 0, %s21
      %p18 = scmp.ge.s32.totalorder %s17, 4
      %s24 = sphi 0, %s36
      %s25 = sphi 0, %s32
      %s26 = sphi 0, %s24
      %s27 = sphi 0, %s25
      %s28 = sphi 0, %s26
      %s29 = sphi 0, %s27
      %s41 = sphi 0, %s43
      %s44 = sphi 0, %s41
      %s45 = sphi 0, %s44
      %s61 = sphi 0, %s45
      %s69 = sphi 0, %s71
      %s72 = sphi 0, %s69
      %s73 = sphi 0, %s72
      %s89 = sphi 0, %s73
      %s97 = sphi 0, %s99
      %s100 = sphi 0, %s97
      %s101 = sphi 0, %s100
      %s117 = sphi 0, %s101
    $region4: #{tpu_custom_call.1} parent=1 // loop_header_branch
      %20 = sbr.rel (%p18) target = $region8
    $region5: #{tpu_custom_call.1} parent=1 // loop_body
      %s22 = ssub.s32 %s17, 1
      %s23 = ssub.s32 %s17, 2
      %s30 = sadd.s32 1, %s25
      %p31 = scmp.ge.s32.totalorder %s30, 1
      %s32 = scalar_select %p31, 0, %s30
      %s33 = sadd.s32 1, %s24
      %s34 = scalar_select %p31, %s33, %s24
      %p35 = scmp.ge.s32.totalorder %s34, 2
      %s36 = scalar_select %p35, 0, %s34
      %s37 = ssub.s32 %s24, %s36
      %s38 = ssub.s32 %s25, %s32
      %s39 = sor.u32 %s37, %s38
      %p40 = scmp.eq.s32.totalorder %s39, 0
      %s42 = sadd.s32 %s41, 1
      %s43 = scalar_select %p40, %s41, %s42
      %p46 = pneg %p40
      %p47 = scmp.eq.s32.totalorder %s17, 1
      %p48 = por %p46, %p47
      %p49 = scmp.ne.s32.totalorder %s41, %s44
      %p50 = scmp.eq.s32.totalorder %s17, 0
      %p51 = por %p49, %p50
      %p52 = scmp.ne.s32.totalorder %s41, %s44
      %p53 = scmp.eq.s32.totalorder %s22, 1
      %p54 = por %p52, %p53
      %p55 = scmp.ne.s32.totalorder %s44, %s45
      %p56 = scmp.eq.s32.totalorder %s22, 0
      %p57 = por %p55, %p56
      %p58 = scmp.ne.s32.totalorder %s44, %s45
      %p59 = scmp.eq.s32.totalorder %s23, 1
      %p60 = por %p58, %p59
      %p62 = scmp.ne.s32.totalorder %s45, %s61
      %p63 = scmp.eq.s32.totalorder %s23, 0
      %p64 = por %p62, %p63
      %s65 = ssub.s32 %s24, %s36
      %s66 = ssub.s32 %s25, %s32
      %s67 = sor.u32 %s65, %s66
      %p68 = scmp.eq.s32.totalorder %s67, 0
      %s70 = sadd.s32 %s69, 1
      %s71 = scalar_select %p68, %s69, %s70
      %p74 = pneg %p68
      %p75 = scmp.eq.s32.totalorder %s17, 1
      %p76 = por %p74, %p75
      %p77 = scmp.ne.s32.totalorder %s69, %s72
      %p78 = scmp.eq.s32.totalorder %s17, 0
      %p79 = por %p77, %p78
      %p80 = scmp.ne.s32.totalorder %s69, %s72
      %p81 = scmp.eq.s32.totalorder %s22, 1
      %p82 = por %p80, %p81
      %p83 = scmp.ne.s32.totalorder %s72, %s73
      %p84 = scmp.eq.s32.totalorder %s22, 0
      %p85 = por %p83, %p84
      %p86 = scmp.ne.s32.totalorder %s72, %s73
      %p87 = scmp.eq.s32.totalorder %s23, 1
      %p88 = por %p86, %p87
      %p90 = scmp.ne.s32.totalorder %s73, %s89
      %p91 = scmp.eq.s32.totalorder %s23, 0
      %p92 = por %p90, %p91
      %s93 = ssub.s32 %s24, %s36
      %s94 = ssub.s32 %s25, %s32
      %s95 = sor.u32 %s93, %s94
      %p96 = scmp.eq.s32.totalorder %s95, 0
      %s98 = sadd.s32 %s97, 1
      %s99 = scalar_select %p96, %s97, %s98
      %p102 = pneg %p96
      %p103 = scmp.eq.s32.totalorder %s17, 1
      %p104 = por %p102, %p103
      %p105 = scmp.ne.s32.totalorder %s97, %s100
      %p106 = scmp.eq.s32.totalorder %s17, 0
      %p107 = por %p105, %p106
      %p108 = scmp.ne.s32.totalorder %s97, %s100
      %p109 = scmp.eq.s32.totalorder %s22, 1
      %p110 = por %p108, %p109
      %p111 = scmp.ne.s32.totalorder %s100, %s101
      %p112 = scmp.eq.s32.totalorder %s22, 0
      %p113 = por %p111, %p112
      %p114 = scmp.ne.s32.totalorder %s100, %s101
      %p115 = scmp.eq.s32.totalorder %s23, 1
      %p116 = por %p114, %p115
      %p118 = scmp.ne.s32.totalorder %s101, %s117
      %p119 = scmp.eq.s32.totalorder %s23, 0
      %p120 = por %p118, %p119
      %p121 = scmp.le.s32.totalorder 1, %s17
      %p122 = scmp.lt.s32.totalorder %s17, 3
      %p123 = pnand %p121, %p122
      %p124 = pneg %p123
      // Predicated region
      $region9: #{tpu_custom_call.1} parent=5 // pred_check
        _
      $region10: #{tpu_custom_call.1} parent=5 // pred_check_branch
        %126 = sbr.rel (%p123) target = $region12
      $region11: #{tpu_custom_call.1} parent=5 // pred_region
        %s127 = ssub.s32 %s17, 1
      $region12: #{tpu_custom_call.1} parent=5 // pred_fallthru
        _
      %p128 = scmp.lt.s32.totalorder %s17, 2
      // Predicated region
      $region13: #{tpu_custom_call.1} parent=5 // pred_check
        %p129 = pneg %p128
      $region14: #{tpu_custom_call.1} parent=5 // pred_check_branch
        %131 = sbr.rel (%p129) target = $region16
      $region15: #{tpu_custom_call.1} parent=5 // pred_region
        // Predicated region
        $region17: #{tpu_custom_call.1} parent=15 // pred_check
          %p132 = pneg %p51
        $region18: #{tpu_custom_call.1} parent=15 // pred_check_branch
          %134 = sbr.rel (%p132) target = $region20
        $region19: #{tpu_custom_call.1} parent=15 // pred_region
          %s135 = sand.u32 %s41, 1
          %s136 = scalar_lea.sflag [#allocation3], %s135
          %s137 = sand.u32 %s41, 1
          %s138 = smul.addr %s137, 8
          %s139 = scalar_lea.vmem [#allocation2], %s138
          %s140 = smul.u32 2, %s25
          %s142 = ssub.s32 128, 128
          %143 = vsyncadd %s136, %s142
          %s144 = smul.addr %s24, 2
          %s145 = sadd.s32 %s140, %s144
          %s146 = smul.addr %s145, 64
          %s147 = scalar_lea.hbm %s0, %s146
          %s149 = sshll.u32 %s139, 4
          %s150 = int_to_ptr.vmem [resolvable:$true] %s149
          %152 = dma.hbm_to_vmem [thread:$0]  %s147, 128, %s150, %s136
        $region20: #{tpu_custom_call.1} parent=15 // pred_fallthru
          _
        // Predicated region
        $region21: #{tpu_custom_call.1} parent=15 // pred_check
          %p153 = pneg %p79
        $region22: #{tpu_custom_call.1} parent=15 // pred_check_branch
          %155 = sbr.rel (%p153) target = $region24
        $region23: #{tpu_custom_call.1} parent=15 // pred_region
          %s156 = sand.u32 %s69, 1
          %s157 = scalar_lea.sflag [#allocation6], %s156
          %s158 = sand.u32 %s69, 1
          %s159 = smul.addr %s158, 2
          %s160 = scalar_lea.vmem [#allocation5], %s159
          %s161 = smul.u32 2, %s25
          %s163 = ssub.s32 32, 32
          %164 = vsyncadd %s157, %s163
          %s165 = smul.addr %s24, 2
          %s166 = sadd.s32 %s161, %s165
          %s167 = smul.addr %s166, 16
          %s168 = scalar_lea.hbm %s1, %s167
          %s170 = sshll.u32 %s160, 4
          %s171 = int_to_ptr.vmem [resolvable:$true] %s170
          %173 = dma.hbm_to_vmem [thread:$0]  %s168, 32, %s171, %s157
        $region24: #{tpu_custom_call.1} parent=15 // pred_fallthru
          _
      $region16: #{tpu_custom_call.1} parent=5 // pred_fallthru
        _
      %p174 = scmp.le.s32.totalorder 1, %s17
      %p175 = scmp.lt.s32.totalorder %s17, 3
      %p176 = pnand %p174, %p175
      %p177 = pneg %p176
      // Predicated region
      $region25: #{tpu_custom_call.1} parent=5 // pred_check
        _
      $region26: #{tpu_custom_call.1} parent=5 // pred_check_branch
        %179 = sbr.rel (%p176) target = $region28
      $region27: #{tpu_custom_call.1} parent=5 // pred_region
        %s180 = ssub.s32 %s17, 1
        %s181 = sand.u32 %s44, 1
        %s182 = scalar_lea.sflag [#allocation3], %s181
        %s183 = sand.u32 %s44, 1
        %s184 = smul.addr %s183, 8
        %s185 = scalar_lea.vmem [#allocation2], %s184
        // Predicated region
        $region29: #{tpu_custom_call.1} parent=27 // pred_check
          %p186 = pneg %p57
        $region30: #{tpu_custom_call.1} parent=27 // pred_check_branch
          %188 = sbr.rel (%p186) target = $region32
        $region31: #{tpu_custom_call.1} parent=27 // pred_region
          %189 = dma.done %s182, 128
        $region32: #{tpu_custom_call.1} parent=27 // pred_fallthru
          _
        %s190 = sand.u32 %s72, 1
        %s191 = scalar_lea.sflag [#allocation6], %s190
        %s192 = sand.u32 %s72, 1
        %s193 = smul.addr %s192, 2
        %s194 = scalar_lea.vmem [#allocation5], %s193
        // Predicated region
        $region33: #{tpu_custom_call.1} parent=27 // pred_check
          %p195 = pneg %p85
        $region34: #{tpu_custom_call.1} parent=27 // pred_check_branch
          %197 = sbr.rel (%p195) target = $region36
        $region35: #{tpu_custom_call.1} parent=27 // pred_region
          %198 = dma.done %s191, 32
        $region36: #{tpu_custom_call.1} parent=27 // pred_fallthru
          _
        %s199 = sand.u32 %s44, 1
        %s200 = scalar_lea.sflag [#allocation3], %s199
        %s201 = sand.u32 %s44, 1
        %s202 = smul.addr %s201, 8
        %s203 = scalar_lea.vmem [#allocation2], %s202
        %p204 = pneg %p57
        %p205 = pneg %p54
        %s206 = sand.u32 %s72, 1
        %s207 = scalar_lea.sflag [#allocation6], %s206
        %s208 = sand.u32 %s72, 1
        %s209 = smul.addr %s208, 2
        %s210 = scalar_lea.vmem [#allocation5], %s209
        %p211 = pneg %p85
        %p212 = pneg %p82
        %p213 = pneg %p113
        %p214 = pneg %p110
        %s215 = sand.u32 %s100, 1
        %s216 = scalar_lea.sflag [#allocation4], %s215
        %s217 = sand.u32 %s100, 1
        %s218 = smul.addr %s217, 4
        %s219 = scalar_lea.vmem [#allocation7], %s218
        %s220 = smul.u32 2, %s27
        %s221 = smul.u32 2, %s27
        %v222 = vld [vmem:[%s185] sm:$0xff]
        %v223 = vld [vmem:[%s194] sm:$0x3]
        %s224 = smul.u32 %s27, 256
        %v225 = vlaneseq
        %v226 = vand.u32 %v225, 127
        %v227 = vadd.s32 %v226, 128
        %v228 = vstv %s224
        %v229 = vadd.s32 %v228, %v226
        %v230 = vadd.s32 %v228, %v227
        %vm231 = vcmp.ne.s32.totalorder %v223, 4294967196
        %vm232 = vcmp.lt.s32.totalorder %v229, 256
        %vm233 = vcmp.lt.s32.totalorder %v230, 256
        %v234 = vsel %vm232, 1, 0
        %v235 = vsel %vm233, 1, 0
        %v236 = vcombine.low %v234, %v235
        %v238 = vunpack.c.l.s4 1966171168
        %v239 = vunpack.c.0.s8 %v238
        %v240 = vlaneseq
        %v241 = vshrl.u32 %v240, 7
        %v242 = vsub.s32 %v239, %v241
        %v243 = vrot.slane %v236, %v242
        %v245 = vunpack.c.l.s4 1966171168
        %v246 = vunpack.c.0.s8 %v245
        %v247 = vlaneseq
        %v248 = vshrl.u32 %v247, 7
        %v249 = vsub.s32 %v246, %v248
        %v250 = vrot.slane %v243, %v249
        %vm251 = vcmp.ne.s32.totalorder %v250, 0
        %vm252 = vmand %vm231, %vm251
        %v253 = vsel %vm252, %v223, 0
        %v255 = vcombine.high %v222, %v222
        %vm257 = vcmask 1043456
        %v258 = vsel %vm257, %v222, -inf
        %v259 = vrot.slane %v258, 4
        %v260 = vmax.f32 %v258, %v259
        %v261 = vrot.slane %v260, 2
        %v262 = vmax.f32 %v260, %v261
        %v263 = vrot.slane %v262, 1
        %v264 = vmax.f32 %v262, %v263
        %v265 = vsel %vm257, %v255, -inf
        %v266 = vrot.slane %v265, 4
        %v267 = vmax.f32 %v265, %v266
        %v268 = vrot.slane %v267, 2
        %v269 = vmax.f32 %v267, %v268
        %v270 = vrot.slane %v269, 1
        %v271 = vmax.f32 %v269, %v270
        %v272 = vsel %vm257, %v222, 0.0
        %v273 = vrot.slane %v272, 4
        %v274 = vadd.f32 %v272, %v273
        %v275 = vrot.slane %v274, 2
        %v276 = vadd.f32 %v274, %v275
        %v277 = vrot.slane %v276, 1
        %v278 = vadd.f32 %v276, %v277
        %v279 = vsel %vm257, %v255, 0.0
        %v280 = vrot.slane %v279, 4
        %v281 = vadd.f32 %v279, %v280
        %v282 = vrot.slane %v281, 2
        %v283 = vadd.f32 %v281, %v282
        %v284 = vrot.slane %v283, 1
        %v285 = vadd.f32 %v283, %v284
        %v286 = vlaneseq
        %v287 = vshrl.u32 %v286, 7
        %v288 = vlaneseq
        %v289 = vshrl.u32 %v288, 7
        %v290 = vsub.s32 0, %v289
        %v291 = vrot.slane %v253, %v290
        %v292 = vlaneseq
        %v293 = vshrl.u32 %v292, 7
        %v294 = vsub.s32 1, %v293
        %v295 = vrot.slane %v253, %v294
        %vm296 = vcmp.eq.s32.totalorder %v287, %v291
        %vm297 = vcmp.eq.s32.totalorder %v287, %v295
        %v298 = vsel %vm296, %v222, 0.0
        %v299 = vsel %vm297, %v255, 0.0
        %v300 = vsel %vm257, %v298, 0.0
        %v301 = vrot.slane %v300, 4
        %v302 = vadd.f32 %v300, %v301
        %v303 = vrot.slane %v302, 2
        %v304 = vadd.f32 %v302, %v303
        %v305 = vrot.slane %v304, 1
        %v306 = vadd.f32 %v304, %v305
        %v307 = vsel %vm257, %v299, 0.0
        %v308 = vrot.slane %v307, 4
        %v309 = vadd.f32 %v307, %v308
        %v310 = vrot.slane %v309, 2
        %v311 = vadd.f32 %v309, %v310
        %v312 = vrot.slane %v311, 1
        %v313 = vadd.f32 %v311, %v312
        %v316 = vcombine.low %v264, %v271
        %v318 = vsub.f32 %v222, %v316
        %v319 = vmul.f32 %v318, 1.442695
        %v320 = vpow.pop %v319
        %v322 = vcombine.high %v320, %v320
        %v324 = vsel %vm257, %v320, 0.0
        %v325 = vrot.slane %v324, 4
        %v326 = vadd.f32 %v324, %v325
        %v327 = vrot.slane %v326, 2
        %v328 = vadd.f32 %v326, %v327
        %v329 = vrot.slane %v328, 1
        %v330 = vadd.f32 %v328, %v329
        %v331 = vsel %vm257, %v322, 0.0
        %v332 = vrot.slane %v331, 4
        %v333 = vadd.f32 %v331, %v332
        %v334 = vrot.slane %v333, 2
        %v335 = vadd.f32 %v333, %v334
        %v336 = vrot.slane %v335, 1
        %v337 = vadd.f32 %v335, %v336
        %v338 = vlog2.pop %v330
        %v339 = vmul.f32 %v338, 0.6931472
        %v340 = vlog2.pop %v337
        %v341 = vmul.f32 %v340, 0.6931472
        %v342 = vmul.f32 %v264, 4.0
        %v343 = vmul.f32 %v271, 4.0
        %v344 = vsub.f32 %v278, %v342
        %v345 = vsub.f32 %v285, %v343
        %v346 = vsub.f32 %v306, %v264
        %v347 = vsub.f32 %v313, %v271
        %v348 = vmul.f32 %v344, 0.025
        %v349 = vmul.f32 %v345, 0.025
        %v350 = vmul.f32 %v346, 0.875
        %v351 = vmul.f32 %v347, 0.875
        %v352 = vadd.f32 %v348, %v350
        %v353 = vadd.f32 %v349, %v351
        %v354 = vmul.f32 %v339, 0.975
        %v355 = vmul.f32 %v341, 0.975
        %v356 = vsub.f32 %v352, %v354
        %v357 = vsub.f32 %v353, %v355
        %v358 = vsub.f32 0.0, %v356
        %v359 = vsub.f32 0.0, %v357
        %v362 = vcombine.low %v358, %v359
        %v364 = vunpack.c.l.s4 1966171168
        %v365 = vunpack.c.0.s8 %v364
        %v366 = vlaneseq
        %v367 = vshrl.u32 %v366, 7
        %v368 = vsub.s32 %v365, %v367
        %v369 = vrot.slane %v362, %v368
        %v371 = vunpack.c.l.s4 1966171168
        %v372 = vunpack.c.0.s8 %v371
        %v373 = vlaneseq
        %v374 = vshrl.u32 %v373, 7
        %v375 = vsub.s32 %v372, %v374
        %v376 = vrot.slane %v369, %v375
        %v378 = vsel %vm252, %v376, 0.0
        %v379 = vsel %vm252, 1.0, 0.0
        %vm380 = vcmp.eq.s32.totalorder %v287, 0
        %v382 = vlaneseq
        %v383 = vshrl.u32 %v382, 7
        %v384 = vsub.s32 0, %v383
        %v385 = vrot.slane %v378, %v384
        %v386 = vlaneseq
        %v387 = vshrl.u32 %v386, 7
        %v388 = vsub.s32 1, %v387
        %v389 = vrot.slane %v378, %v388
        %v393 = vlaneseq
        %v394 = vshrl.u32 %v393, 7
        %v395 = vsub.s32 0, %v394
        %v396 = vrot.slane %v379, %v395
        %v397 = vlaneseq
        %v398 = vshrl.u32 %v397, 7
        %v399 = vsub.s32 1, %v398
        %v400 = vrot.slane %v379, %v399
        %v403 = vsel %vm380, %v385, %v396
        %v404 = vsel %vm380, %v389, %v400
        %v407 = vcombine.low %v403, %v404
        %v409 = vunpack.c.l.s4 1983009808
        %v410 = vunpack.c.0.s8 %v409
        %v411 = vlaneseq
        %v412 = vshrl.u32 %v411, 7
        %v413 = vsub.s32 %v410, %v412
        %v414 = vrot.slane %v407, %v413
        %416 = vst [vmem:[%s219] sm:$0xf] %v414
        %s417 = sand.u32 %s100, 1
        %s418 = scalar_lea.sflag [#allocation4], %s417
        %s419 = sand.u32 %s100, 1
        %s420 = smul.addr %s419, 4
        %s421 = scalar_lea.vmem [#allocation7], %s420
        // Predicated region
        $region37: #{tpu_custom_call.1} parent=27 // pred_check
          %p422 = pneg %p110
        $region38: #{tpu_custom_call.1} parent=27 // pred_check_branch
          %424 = sbr.rel (%p422) target = $region40
        $region39: #{tpu_custom_call.1} parent=27 // pred_region
          %s426 = ssub.s32 64, 64
          %427 = vsyncadd %s418, %s426
          %s428 = smul.addr %s27, 2
          %s429 = smul.addr %s26, 2
          %s430 = sadd.s32 %s428, %s429
          %s431 = smul.addr %s430, 32
          %s432 = scalar_lea.hbm %s2, %s431
          %s434 = sshll.u32 %s421, 4
          %s435 = int_to_ptr.vmem [resolvable:$true] %s434
          %437 = dma.vmem_to_hbm [thread:$0]  %s435, 64, %s432, %s418
        $region40: #{tpu_custom_call.1} parent=27 // pred_fallthru
          _
      $region28: #{tpu_custom_call.1} parent=5 // pred_fallthru
        _
      %p438 = scmp.le.s32.totalorder 2, %s17
      // Predicated region
      $region41: #{tpu_custom_call.1} parent=5 // pred_check
        %p439 = pneg %p438
      $region42: #{tpu_custom_call.1} parent=5 // pred_check_branch
        %441 = sbr.rel (%p439) target = $region44
      $region43: #{tpu_custom_call.1} parent=5 // pred_region
        %s442 = ssub.s32 %s17, 2
        // Predicated region
        $region45: #{tpu_custom_call.1} parent=43 // pred_check
          %p443 = pneg %p116
        $region46: #{tpu_custom_call.1} parent=43 // pred_check_branch
          %445 = sbr.rel (%p443) target = $region48
        $region47: #{tpu_custom_call.1} parent=43 // pred_region
          %s446 = sand.u32 %s101, 1
          %s447 = scalar_lea.sflag [#allocation4], %s446
          %s448 = sand.u32 %s101, 1
          %s449 = smul.addr %s448, 4
          %s450 = scalar_lea.vmem [#allocation7], %s449
          %451 = dma.done %s447, 64
        $region48: #{tpu_custom_call.1} parent=43 // pred_fallthru
          _
      $region44: #{tpu_custom_call.1} parent=5 // pred_fallthru
        _
    $region6: #{tpu_custom_call.1} parent=1 // loop_footer
      %s21 = sadd.s32 1, %s17
    $region7: #{tpu_custom_call.1} parent=1 // loop_footer_branch
      %16 = sbr.rel target = $region3
    $region8: #{tpu_custom_call.1} parent=1 // loop_exit
      _
    %452 = vsyncpa [#allocation3], 1
    %s453 = scalar_lea.sflag [#allocation3], 1
    %454 = vsyncpa %s453, 1
    %455 = vsyncpa [#allocation6], 1
    %s456 = scalar_lea.sflag [#allocation6], 1
    %457 = vsyncpa %s456, 1
    %458 = vsyncpa [#allocation4], 1
    %s459 = scalar_lea.sflag [#allocation4], 1
    %460 = vsyncpa %s459, 1

</llo_original>
